<compile_context>
chip_gen: v7x
topology: tpu7x:2x2x1
jax: 0.10.0
libtpu: 0.0.40
codegen_flags: <defaults>
</compile_context>

<pallas_src>
import math

import jax
import jax.numpy as jnp
from jax.experimental import pallas as pl
from jax.experimental.pallas import tpu as pltpu

STD = 0.05                  # std1 in the torch module
NOISE_BUFFER_BATCH = 100    # leading dim of the registered noise buffer

_LANE = 128
_TILE_ALIGN = 2 * _LANE                 # keep each Box-Muller half lane-aligned
_TILE_BYTES_BUDGET = 2 * 1024 * 1024    # per-array block; safe on v5e/v6e/v7x


def _round_up(x, m):
    return ((x + m - 1) // m) * m


def _gaussian_noise_kernel(seed_ref, x_ref, o_ref):
    """x_ref/o_ref: (B, C, TILE_HW). Adds fresh N(0, STD) noise, broadcast over C."""
    b, _, tile_hw = x_ref.shape
    half = tile_hw // 2

    # Independent PRNG stream per grid tile (and per caller-provided seed).
    pltpu.prng_seed(seed_ref[0], pl.program_id(0))

    # Two uniform fields of half width; Box-Muller uses BOTH outputs, so the
    # PRNG draws and log/sqrt/cos/sin pushes per sample are halved.
    bits1 = pltpu.bitcast(pltpu.prng_random_bits((b, half)), jnp.uint32)
    bits2 = pltpu.bitcast(pltpu.prng_random_bits((b, half)), jnp.uint32)

    def uniform_1_2(bits):
        # Mantissa trick: uint32 bits -> f32 in [1, 2) with pure bitwise ops.
        mant = (bits & jnp.uint32(0x007FFFFF)) | jnp.uint32(0x3F800000)
        return pltpu.bitcast(mant, jnp.float32)

    u1 = jnp.float32(2.0) - uniform_1_2(bits1)      # (0, 1] -> log() finite
    u2 = uniform_1_2(bits2) - jnp.float32(1.0)      # [0, 1)
    r = jnp.sqrt(jnp.float32(-2.0) * jnp.log(u1))
    theta = jnp.float32(2.0 * math.pi) * u2
    z = jnp.concatenate([r * jnp.cos(theta), r * jnp.sin(theta)], axis=-1)

    # Cast to the activation dtype BEFORE the channel broadcast (hoisted once
    # per block), then add with the (B, 1, TILE_HW) -> (B, C, TILE_HW) bcast.
    noise = (jnp.float32(STD) * z).astype(x_ref.dtype)
    o_ref[...] = x_ref[...] + noise[:, None, :]


def _add_noise_kernel(x_ref, n_ref, o_ref):
    """Fallback path (noise precomputed outside): broadcast add over C."""
    o_ref[...] = x_ref[...] + n_ref[...][:, None, :]


def gaussian_noise(x, seed):
    """Forward pass of GaussianNoise: x + N(0, STD) noise per (b, h, w), bcast over C."""
    B, C, H, W = x.shape
    # Mirrors `self.noise2[:c]`: the registered buffer must cover the batch.
    assert B <= NOISE_BUFFER_BATCH, "batch larger than noise buffer"
    # TODO(synk): the torch module keeps the sampled noise in a persistent
    # registered buffer (noise2); here it is regenerated on-chip each call and
    # not exposed as state (forward output distribution is identical).

    hw = H * W
    itemsize = jnp.dtype(x.dtype).itemsize

    # Lane-dense tiling of the flattened spatial axis.
    hw_aligned = _round_up(hw, _TILE_ALIGN)
    budget_hw = max(
        _TILE_ALIGN,
        (_TILE_BYTES_BUDGET // (B * C * itemsize)) // _TILE_ALIGN * _TILE_ALIGN,
    )
    tile_hw = min(hw_aligned, budget_hw)
    hw_padded = _round_up(hw, tile_hw)
    n_tiles = hw_padded // tile_hw

    x3 = x.reshape(B, C, hw)
    if hw_padded != hw:
        # Pad so the store path stays unmasked (last dim multiple of 128).
        x3 = jnp.pad(x3, ((0, 0), (0, 0), (0, hw_padded - hw)))

    if jax.default_backend() == "tpu":
        seed_arr = jnp.asarray([seed], dtype=jnp.int32)
        cost = pl.CostEstimate(
            flops=int(B * C * hw_padded + 8 * B * hw_padded),
            transcendentals=int(2 * B * hw_padded),
            bytes_accessed=int(2 * B * C * hw_padded * itemsize + 4),
        )
        out = pl.pallas_call(
            _gaussian_noise_kernel,
            out_shape=jax.ShapeDtypeStruct((B, C, hw_padded), x.dtype),
            grid_spec=pltpu.PrefetchScalarGridSpec(
                num_scalar_prefetch=1,          # seed lands in SMEM
                grid=(n_tiles,),
                in_specs=[pl.BlockSpec((B, C, tile_hw), lambda i, seed: (0, 0, i))],
                out_specs=pl.BlockSpec((B, C, tile_hw), lambda i, seed: (0, 0, i)),
            ),
            compiler_params=pltpu.CompilerParams(
                dimension_semantics=("parallel",)),
            cost_estimate=cost,
        )(seed_arr, x3)
    else:
        # Non-TPU backend (CPU interpreter): no hardware PRNG primitives, so
        # generate the (B, HW) noise field with jax.random and keep the same
        # tiled broadcast-add kernel.
        noise = (STD * jax.random.normal(
            jax.random.PRNGKey(seed), (B, hw_padded), dtype=jnp.float32)
        ).astype(x.dtype)
        out = pl.pallas_call(
            _add_noise_kernel,
            out_shape=jax.ShapeDtypeStruct((B, C, hw_padded), x.dtype),
            grid=(n_tiles,),
            in_specs=[pl.BlockSpec((B, C, tile_hw), lambda i: (0, 0, i)),
                      pl.BlockSpec((B, tile_hw), lambda i: (0, i))],
            out_specs=pl.BlockSpec((B, C, tile_hw), lambda i: (0, 0, i)),
        )(x3, noise)

    if hw_padded != hw:
        out = out[:, :, :hw]
    return out.reshape(B, C, H, W)


if __name__ == "__main__":
    key = jax.random.PRNGKey(0)
    # Small NCHW input consistent with the module's usage (x + noise[:B]).
    x = jax.random.normal(key, (2, 4, 16, 16), dtype=jnp.float32)

    y = gaussian_noise(x, seed=0)
    y = jax.block_until_ready(y)

    # Sanity checks: shape preserved, noise is small, finite, broadcast over C.
    assert y.shape == x.shape
    diff = y - x
    assert bool(jnp.all(jnp.isfinite(diff)))
    # noise broadcast over channels -> identical (to rounding) across C
    assert bool(jnp.allclose(diff[:, 0], diff[:, 1], atol=1e-6))
    # empirical std should be in the right ballpark of 0.05
    assert 0.01 < float(jnp.std(diff)) < 0.2

    print("KERNEL_OK")
</pallas_src>

<mosaic_0001>
module attributes {stable_mosaic.version = 11 : i64} {
  func.func @_add_noise_kernel(%arg0: i32, %arg1: memref<2x4x256xf32, #tpu.memory_space<vmem>>, %arg2: memref<2x256xf32, #tpu.memory_space<vmem>>, %arg3: memref<2x4x256xf32, #tpu.memory_space<vmem>>) attributes {dimension_semantics = [#tpu.dimension_semantics<arbitrary>], iteration_bounds = array<i64: 1>, scalar_prefetch = 0 : i64, scratch_operands = 0 : i64, tpu.core_type = #tpu.core_type<tc>, window_params = [{transform_indices = @transform_0, window_bounds = array<i64: 2, 4, 256>}, {transform_indices = @transform_1, window_bounds = array<i64: 2, 256>}, {transform_indices = @transform_2, window_bounds = array<i64: 2, 4, 256>}]} {
    %c0 = arith.constant 0 : index
    %c0_0 = arith.constant 0 : index
    %c0_1 = arith.constant 0 : index
    %0 = vector.load %arg1[%c0, %c0_0, %c0_1] : memref<2x4x256xf32, #tpu.memory_space<vmem>>, vector<2x4x256xf32>
    %c0_2 = arith.constant 0 : index
    %c0_3 = arith.constant 0 : index
    %1 = vector.load %arg2[%c0_2, %c0_3] : memref<2x256xf32, #tpu.memory_space<vmem>>, vector<2x256xf32>
    %2 = vector.shape_cast %1 : vector<2x256xf32> to vector<2x1x256xf32>
    %3 = vector.broadcast %2 : vector<2x1x256xf32> to vector<2x4x256xf32>
    %4 = arith.addf %0, %3 : vector<2x4x256xf32>
    %c0_4 = arith.constant 0 : index
    %c0_5 = arith.constant 0 : index
    %c0_6 = arith.constant 0 : index
    %5 = vector.load %arg3[%c0_4, %c0_5, %c0_6] : memref<2x4x256xf32, #tpu.memory_space<vmem>>, vector<2x4x256xf32>
    tpu.vector_store %arg3[%c0_4, %c0_5, %c0_6], %4 {strides = array<i32>} : memref<2x4x256xf32, #tpu.memory_space<vmem>>, vector<2x4x256xf32>,
    return
  }
  func.func @transform_0(%arg0: i32) -> (i32, i32, i32) {
    %c0_i32 = arith.constant 0 : i32
    %c0_i32_0 = arith.constant 0 : i32
    %c0_i32_1 = arith.constant 0 : i32
    return %c0_i32, %c0_i32_0, %arg0 : i32, i32, i32
  }
  func.func @transform_1(%arg0: i32) -> (i32, i32) {
    %c0_i32 = arith.constant 0 : i32
    %c0_i32_0 = arith.constant 0 : i32
    return %c0_i32, %arg0 : i32, i32
  }
  func.func @transform_2(%arg0: i32) -> (i32, i32, i32) {
    %c0_i32 = arith.constant 0 : i32
    %c0_i32_0 = arith.constant 0 : i32
    %c0_i32_1 = arith.constant 0 : i32
    return %c0_i32, %c0_i32_0, %arg0 : i32, i32, i32
  }
}

</mosaic_0001>

<llo_original>
// kernel: tpu_custom_call.1
$region0: #{tpu_custom_call.1}
  #allocation0 [shape = 'u32[]', space=smem, size = 0x4, offset = 0x4, fixed_abs, tag = 'smem constant byte address 0x4 - core index']
  #allocation1 [shape = 'u32[144,128]{1,0:T(1,128)}', space=vmem, size = 0x12000, scoped, tag = 'internal scratch']
  %s0 = inlined_call_operand.hbm [shape: f32[2,4,256], index: 0, kind: input, shape index: {}]
  %s1 = inlined_call_operand.hbm [shape: f32[2,256], index: 1, kind: input, shape index: {}]
  %s2 = inlined_call_operand.hbm [shape: f32[2,4,256], index: 2, kind: output, shape index: {}]
  %s3 = sld [smem:[#allocation0]]
  $region26: #{tpu_custom_call.1} parent=0
    _
  %s5 = ssub.s32 1, %s3
  %s6 = scalar_select 0, %s5, %s3
  $region1: #{tpu_custom_call.1} parent=0
    #allocation2 [shape = 'u8[8192]{0}', space=vmem, size = 0x2000, scoped, tag = 'input window, operand 0, single buffered']
    #allocation3 [shape = 's32[1]{0}', space=sflag, size = 0x4, scoped, tag = 'scoped memory for tpu_custom_call.1']
    #allocation4 [shape = 's32[1]{0}', space=sflag, size = 0x4, scoped, tag = 'scoped memory for tpu_custom_call.1']
    #allocation5 [shape = 'u8[2048]{0}', space=vmem, size = 0x800, scoped, tag = 'input window, operand 1, single buffered']
    #allocation6 [shape = 's32[1]{0}', space=sflag, size = 0x4, scoped, tag = 'scoped memory for tpu_custom_call.1']
    #allocation7 [shape = 'u8[8192]{0}', space=vmem, size = 0x2000, scoped, tag = 'output window, operand 0, single buffered']
    %7 = vsyncpa [#allocation3], 0
    %8 = vsyncpa [#allocation6], 0
    %9 = vsyncpa [#allocation4], 0
    // Predicated region
    $region2: #{tpu_custom_call.1} parent=1 // pred_check
      _
    $region3: #{tpu_custom_call.1} parent=1 // pred_check_branch
      %11 = sbr.rel (0) target = $region5
    $region4: #{tpu_custom_call.1} parent=1 // pred_region
      %s13 = ssub.s32 256, 256
      %14 = vsyncadd [#allocation3], %s13
      %s15 = sshll.u32 [#allocation2], 4
      %s16 = int_to_ptr.vmem [resolvable:$true] %s15
      %21 = dma.hbm_to_vmem [thread:$0]  %s0, 256, %s16, [#allocation3], 128, 128, 8
    $region5: #{tpu_custom_call.1} parent=1 // pred_fallthru
      _
    // Predicated region
    $region6: #{tpu_custom_call.1} parent=1 // pred_check
      _
    $region7: #{tpu_custom_call.1} parent=1 // pred_check_branch
      %23 = sbr.rel (0) target = $region9
    $region8: #{tpu_custom_call.1} parent=1 // pred_region
      %s25 = ssub.s32 64, 64
      %26 = vsyncadd [#allocation6], %s25
      %s28 = sshll.u32 [#allocation5], 4
      %s29 = int_to_ptr.vmem [resolvable:$true] %s28
      %31 = dma.hbm_to_vmem [thread:$0]  %s1, 64, %s29, [#allocation6]
    $region9: #{tpu_custom_call.1} parent=1 // pred_fallthru
      _
    // Predicated region
    $region10: #{tpu_custom_call.1} parent=1 // pred_check
      _
    $region11: #{tpu_custom_call.1} parent=1 // pred_check_branch
      %33 = sbr.rel (0) target = $region13
    $region12: #{tpu_custom_call.1} parent=1 // pred_region
      %34 = dma.done [#allocation3], 256
    $region13: #{tpu_custom_call.1} parent=1 // pred_fallthru
      _
    // Predicated region
    $region14: #{tpu_custom_call.1} parent=1 // pred_check
      _
    $region15: #{tpu_custom_call.1} parent=1 // pred_check_branch
      %36 = sbr.rel (0) target = $region17
    $region16: #{tpu_custom_call.1} parent=1 // pred_region
      %37 = dma.done [#allocation6], 64
    $region17: #{tpu_custom_call.1} parent=1 // pred_fallthru
      _
    %v38 = vld [vmem:[#allocation2] sm:$0xff]
    %v39 = vld [vmem:[#allocation2 + $0x8] sm:$0xff]
    %v40 = vld [vmem:[#allocation5] sm:$0xf]
    %v43 = vunpack.c.l.s4 1966171168
    %v44 = vunpack.c.0.s8 %v43
    %v45 = vlaneseq
    %v46 = vshrl.u32 %v45, 7
    %v47 = vsub.s32 %v44, %v46
    %v48 = vrot.slane %v40, %v47
    %v49 = vcombine.high %v48, %v48
    %v50 = vlaneseq
    %v51 = vshrl.u32 %v50, 7
    %v52 = vsub.s32 0, %v51
    %v53 = vrot.slane %v48, %v52
    %v54 = vlaneseq
    %v55 = vshrl.u32 %v54, 7
    %v56 = vsub.s32 1, %v55
    %v57 = vrot.slane %v48, %v56
    %v58 = vlaneseq
    %v59 = vshrl.u32 %v58, 7
    %v60 = vsub.s32 0, %v59
    %v61 = vrot.slane %v49, %v60
    %v62 = vlaneseq
    %v63 = vshrl.u32 %v62, 7
    %v64 = vsub.s32 1, %v63
    %v65 = vrot.slane %v49, %v64
    %v66 = vcombine.low %v53, %v57
    %v67 = vcombine.low %v61, %v65
    %v70 = vadd.f32 %v38, %v66
    %v71 = vadd.f32 %v39, %v67
    %72 = vst [vmem:[#allocation7] sm:$0xff] %v70
    %73 = vst [vmem:[#allocation7 + $0x8] sm:$0xff] %v71
    // Predicated region
    $region18: #{tpu_custom_call.1} parent=1 // pred_check
      _
    $region19: #{tpu_custom_call.1} parent=1 // pred_check_branch
      %75 = sbr.rel (0) target = $region21
    $region20: #{tpu_custom_call.1} parent=1 // pred_region
      %s77 = ssub.s32 256, 256
      %78 = vsyncadd [#allocation4], %s77
      %s79 = sshll.u32 [#allocation7], 4
      %s80 = int_to_ptr.vmem [resolvable:$true] %s79
      %85 = dma.vmem_to_hbm [thread:$0]  %s80, 256, %s2, [#allocation4], 128, 128, 8
    $region21: #{tpu_custom_call.1} parent=1 // pred_fallthru
      _
    // Predicated region
    $region22: #{tpu_custom_call.1} parent=1 // pred_check
      _
    $region23: #{tpu_custom_call.1} parent=1 // pred_check_branch
      %87 = sbr.rel (0) target = $region25
    $region24: #{tpu_custom_call.1} parent=1 // pred_region
      %88 = dma.done [#allocation4], 256
    $region25: #{tpu_custom_call.1} parent=1 // pred_fallthru
      _
    %89 = vsyncpa [#allocation3], 1
    %90 = vsyncpa [#allocation6], 1
    %91 = vsyncpa [#allocation4], 1

</llo_original>
